<compile_context>
chip_gen: v7x
topology: tpu7x:2x2x1
jax: 0.10.0
libtpu: 0.0.40
codegen_flags: <defaults>
</compile_context>

<pallas_src>
import math

import jax
import jax.numpy as jnp
import numpy as np
from jax.experimental import pallas as pl
from jax.experimental.pallas import tpu as pltpu


# ----------------------------- parameter setup (host-side glue) -------------

def get_1d_dct(i, freq, L):
    result = math.cos(math.pi * freq * (i + 0.5) / L) / math.sqrt(L)
    if freq == 0:
        return result
    return result * math.sqrt(2)


def get_dct_weights_np(width, height, channel,
                       fidx_u=(0, 0, 6, 0, 0, 1, 1, 4, 5, 1, 3, 0, 0, 0, 2, 3),
                       fidx_v=(0, 1, 0, 5, 2, 0, 2, 0, 0, 6, 0, 4, 6, 3, 2, 5)):
    scale_ratio = width // 7
    fidx_u = [u * scale_ratio for u in fidx_u]
    fidx_v = [v * scale_ratio for v in fidx_v]
    w = np.zeros((channel, width, height), dtype=np.float32)
    c_part = channel // len(fidx_u)
    for i, (u_x, v_y) in enumerate(zip(fidx_u, fidx_v)):
        for t_x in range(width):
            for t_y in range(height):
                w[i * c_part:(i + 1) * c_part, t_x, t_y] = (
                    get_1d_dct(t_x, u_x, width) * get_1d_dct(t_y, v_y, height))
    return w


def adaptive_avg_pool_matrix(H, W, h_out, w_out):
    """(h_out*w_out, H*W) matrix implementing torch.adaptive_avg_pool2d."""
    M = np.zeros((h_out * w_out, H * W), dtype=np.float32)
    for i in range(h_out):
        hs, he = (i * H) // h_out, -(-((i + 1) * H) // h_out)
        for j in range(w_out):
            ws, we = (j * W) // w_out, -(-((j + 1) * W) // w_out)
            inv = 1.0 / ((he - hs) * (we - ws))
            for r in range(hs, he):
                for c in range(ws, we):
                    M[i * w_out + j, r * W + c] = inv
    return M


def fold_pool_dct_np(H, W, h_out, w_out, channel):
    """Fold adaptive-avg-pool + DCT weighting into one (C, H*W) weight.

    y[b, c] = sum_hw  w_comb[c, hw] * x[b, c, hw],  w_comb = dct_flat @ pool_mat.
    Matches the PyTorch module's broadcast (pooled (B,C,h,w) * weight (C,w,h)),
    which is only shape-valid for square pooled sizes, hence the assert.
    """
    assert w_out == h_out, "FcaNet DCT broadcast requires width == height"
    dct_w = get_dct_weights_np(w_out, h_out, channel)          # (C, w_out, h_out)
    dct_flat = dct_w.reshape(channel, -1)                      # (C, h_out*w_out)
    pool_mat = adaptive_avg_pool_matrix(H, W, h_out, w_out)    # (h_out*w_out, H*W)
    return (dct_flat @ pool_mat).astype(np.float32), dct_w     # (C, H*W)


# ----------------------------- Pallas kernel --------------------------------

def _fcanet_kernel(x_ref, wc_ref, w1_ref, w2t_ref, o_ref):
    # Per grid step:
    #   x_ref:   (Bt, C, HW)  batch block; C on sublanes, H*W on lanes
    #   wc_ref:  (C, HW)      folded adaptive-pool + DCT weight (any float dtype)
    #   w1_ref:  (C, Cr)      fc1 weight (so that h = y @ w1)
    #   w2t_ref: (C, Cr)      fc2 weight transposed (C on sublanes)
    #   o_ref:   (Bt, C, HW)
    #
    # Squeeze: y[b,c] = sum_hw wc[c,hw] * x[b,c,hw]  (VPU mul + XLU lane reduce).
    # Upcast only inside the product/reduce; do not keep an f32 copy of the
    # whole block live across the excitation path.
    xw = x_ref[...].astype(jnp.float32) * wc_ref[...].astype(jnp.float32)[None, :, :]
    y = jnp.sum(xw, axis=-1, keepdims=True)                                   # (Bt, C, 1)

    # Excitation (tiny, bias-free). C stays on sublanes throughout; no MXU.
    w1 = w1_ref[...].astype(jnp.float32)
    w2t = w2t_ref[...].astype(jnp.float32)
    #   h[b,r] = relu(sum_c y[b,c] * w1[c,r])      (sublane reduce)
    h = jnp.maximum(jnp.sum(y * w1[None, :, :], axis=1, keepdims=True), 0.0)  # (Bt, 1, Cr)
    #   s[b,c] = sigmoid(sum_r h[b,r] * w2[r,c])   (lane reduce over Cr)
    s = jax.nn.sigmoid(jnp.sum(h * w2t[None, :, :], axis=-1, keepdims=True))  # (Bt, C, 1)

    # Gate: re-read the block in its native dtype and lane-broadcast s over HW.
    # Store is unmasked (lane-dense) when HW is a multiple of 128.
    o_ref[...] = (x_ref[...] * s.astype(o_ref.dtype)).astype(o_ref.dtype)


# ----------------------------- block sizing / budgeting ----------------------

def _tpu_budget():
    """Best-effort (per-TensorCore VMEM bytes, TensorCores per chip).

    Falls back to v7x-safe defaults (64 MiB VMEM, 1 TC) if the query fails.
    """
    vmem_bytes = 64 << 20          # v7x has the smallest per-TC VMEM
    num_cores = 1
    try:
        info = pltpu.get_tpu_info()
        vmem_bytes = int(getattr(info, "vmem_capacity_bytes", vmem_bytes))
    except Exception:
        pass
    try:
        kind = jax.devices()[0].device_kind.lower()
        if "v7" in kind:           # v7x: 2 TensorCores per chip
            num_cores = 2
    except Exception:
        pass
    return vmem_bytes, num_cores


def _pick_block_batch(B, per_elem_bytes, weight_bytes, vmem_cap_bytes, num_cores,
                      target_bytes=4 << 20):
    """Batch elements per grid step.

    Targets 2-4 MiB+ blocks to amortize the ~0.35 us/step pipeline overhead,
    bounded by the VMEM budget (in+out double-buffered => 4x block + weights).
    Only on multi-TC chips does it keep >= num_cores grid steps so the
    "parallel" axis can split across TensorCores; single-TC chips (v5e/v6e)
    get the largest single block.
    """
    slack = 2 << 20
    dma_budget = max(per_elem_bytes, (vmem_cap_bytes - weight_bytes - slack) // 4)
    bt = max(1, min(B, min(target_bytes, dma_budget) // per_elem_bytes))
    if num_cores >= 2 and B >= num_cores:
        bt = min(bt, max(1, B // num_cores))
    return int(bt)


# ----------------------------- wrapper ---------------------------------------

def fcanet_forward(x_nchw, w_comb, w1, w2, *, block_batch=None):
    B, C, H, W = x_nchw.shape
    HW = H * W
    Cr = w1.shape[1]
    assert w_comb.shape == (C, HW)
    assert w1.shape == (C, Cr) and w2.shape == (Cr, C)
    # TODO(synk): when H*W is not a multiple of 128 (e.g. 7x7, 14x14 ResNet
    # tails) the gate store is lane-masked; a lane-dense re-layout of the gate
    # path would be needed to recover full store bandwidth there.

    # Free reshape of NCHW (no transpose, no extra HBM traffic).
    x_flat = x_nchw.reshape(B, C, HW)
    # Tiny one-off transpose so C lands on sublanes inside the kernel.
    w2_t = jnp.transpose(w2)                                   # (C, Cr)

    x_itemsize = jnp.dtype(x_nchw.dtype).itemsize
    wc_itemsize = jnp.dtype(w_comb.dtype).itemsize
    per_elem = C * HW * x_itemsize
    # Worst-case weight residency (covers the double-buffered fallback path).
    weight_bytes = 2 * (C * HW * wc_itemsize + 2 * C * Cr * 4)

    vmem_phys, num_cores = _tpu_budget()
    # Usable scoped-VMEM budget: ~48 MiB on v7x (64 MiB), ~96 MiB on v5e/v6e (128 MiB).
    vmem_cap = max(32 << 20, (vmem_phys * 3) // 4)

    bt = block_batch if block_batch is not None else _pick_block_batch(
        B, per_elem, weight_bytes, vmem_cap, num_cores)
    bt = max(1, min(int(bt), B))
    grid = (pl.cdiv(B, bt),)        # masked tail step handles B % bt != 0

    block_bytes = bt * per_elem
    needed = 4 * block_bytes + weight_bytes + (2 << 20)
    vmem_limit = int(min(vmem_cap, max(needed, 8 << 20)))
    # TODO(synk): for oversized layers where even bt=1 exceeds the v7x budget,
    # add a second grid axis over HW (squeeze-accumulate pass, then gate pass).

    # Advisory cost estimate: bandwidth-bound (2 passes over x + weights).
    flops = 3 * B * C * HW + 4 * B * C * Cr
    bytes_accessed = 2 * B * C * HW * x_itemsize + C * HW * wc_itemsize + 2 * C * Cr * 4
    try:
        cost = pl.CostEstimate(flops=flops, transcendentals=B * C,
                               bytes_accessed=bytes_accessed)
    except Exception:
        cost = None

    def _run(single_buffer_weights):
        # Grid-invariant operands use constant index_maps (fetched once by the
        # pipeline); single-buffer them when supported so the big folded
        # weight does not cost 2x VMEM.
        if single_buffer_weights:
            def wspec(shape):
                return pl.BlockSpec(shape, lambda b: (0, 0),
                                    pipeline_mode=pl.Buffered(1))
        else:
            def wspec(shape):
                return pl.BlockSpec(shape, lambda b: (0, 0))
        return pl.pallas_call(
            _fcanet_kernel,
            out_shape=jax.ShapeDtypeStruct((B, C, HW), x_nchw.dtype),
            grid=grid,
            in_specs=[
                pl.BlockSpec((bt, C, HW), lambda b: (b, 0, 0)),
                wspec((C, HW)),
                wspec((C, Cr)),
                wspec((C, Cr)),
            ],
            out_specs=pl.BlockSpec((bt, C, HW), lambda b: (b, 0, 0)),
            compiler_params=pltpu.CompilerParams(
                dimension_semantics=("parallel",),
                vmem_limit_bytes=vmem_limit),
            cost_estimate=cost,
        )(x_flat, w_comb, w1, w2_t)

    try:
        out_flat = _run(True)
    except Exception:
        # Older jax without pipeline_mode=pl.Buffered(1): fall back to the
        # default double-buffered (still correct, slightly more VMEM).
        out_flat = _run(False)

    # Free reshape back to NCHW.
    return out_flat.reshape(B, C, H, W)


# ----------------------------- pure-JAX reference ----------------------------

def fcanet_reference(x, dct_w, w1, w2, h_out, w_out):
    B, C, H, W = x.shape
    # divisible case: adaptive avg pool == uniform average pooling
    pooled = x.reshape(B, C, h_out, H // h_out, w_out, W // w_out).mean(axis=(3, 5))
    y = jnp.sum(pooled * dct_w[None], axis=(2, 3))
    h = jnp.maximum(y @ w1, 0.0)
    s = jax.nn.sigmoid(h @ w2)
    return x * s[:, :, None, None]


# ----------------------------- main ------------------------------------------

if __name__ == "__main__":
    # Module hyperparameters: channel must be divisible by the 16 DCT frequency
    # pairs; pooled width == height (required by the torch broadcast).
    B, C, reduction = 2, 16, 4
    width = height = 8          # pooled / DCT resolution
    H = W = 16                  # input spatial size
    Cr = C // reduction

    key = jax.random.PRNGKey(0)
    kx, k1, k2 = jax.random.split(key, 3)

    x = jax.random.normal(kx, (B, C, H, W), dtype=jnp.float32)

    # Deterministic weights mimicking nn.Linear default uniform init (no bias).
    b1 = 1.0 / math.sqrt(C)
    b2 = 1.0 / math.sqrt(Cr)
    w1 = jax.random.uniform(k1, (C, Cr), minval=-b1, maxval=b1, dtype=jnp.float32)
    w2 = jax.random.uniform(k2, (Cr, C), minval=-b2, maxval=b2, dtype=jnp.float32)

    # Host-side fold of adaptive-avg-pool + DCT weights into one (C, H*W) weight.
    # (On v7x with very large C*HW this can be cast to bf16 to halve its HBM
    #  fetch / VMEM residency -- the kernel accumulates in f32 either way.  We
    #  keep f32 here to preserve the tight reference tolerance.)
    w_comb_np, dct_w_np = fold_pool_dct_np(H, W, height, width, C)
    w_comb = jnp.asarray(w_comb_np)
    dct_w_j = jnp.asarray(dct_w_np)

    out = fcanet_forward(x, w_comb, w1, w2)
    out = jax.block_until_ready(out)

    ref = fcanet_reference(x, dct_w_j, w1, w2, height, width)
    np.testing.assert_allclose(np.asarray(out), np.asarray(ref),
                               rtol=1e-5, atol=1e-5)

    print("KERNEL_OK")
</pallas_src>

<mosaic_0001>
module attributes {stable_mosaic.version = 11 : i64} {
  func.func @_fcanet_kernel(%arg0: i32, %arg1: memref<2x16x256xf32, #tpu.memory_space<vmem>>, %arg2: memref<16x256xf32, #tpu.memory_space<vmem>>, %arg3: memref<16x4xf32, #tpu.memory_space<vmem>>, %arg4: memref<16x4xf32, #tpu.memory_space<vmem>>, %arg5: memref<2x16x256xf32, #tpu.memory_space<vmem>>) attributes {dimension_semantics = [#tpu.dimension_semantics<parallel>], iteration_bounds = array<i64: 1>, scalar_prefetch = 0 : i64, scratch_operands = 0 : i64, tpu.core_type = #tpu.core_type<tc>, window_params = [{transform_indices = @transform_0, window_bounds = array<i64: 2, 16, 256>}, {pipeline_mode = #tpu.pipeline_mode<synchronous>, transform_indices = @transform_1, window_bounds = array<i64: 16, 256>}, {pipeline_mode = #tpu.pipeline_mode<synchronous>, transform_indices = @transform_2, window_bounds = array<i64: 16, 4>}, {pipeline_mode = #tpu.pipeline_mode<synchronous>, transform_indices = @transform_3, window_bounds = array<i64: 16, 4>}, {transform_indices = @transform_4, window_bounds = array<i64: 2, 16, 256>}]} {
    %c0 = arith.constant 0 : index
    %c0_0 = arith.constant 0 : index
    %c0_1 = arith.constant 0 : index
    %0 = vector.load %arg1[%c0, %c0_0, %c0_1] : memref<2x16x256xf32, #tpu.memory_space<vmem>>, vector<2x16x256xf32>
    %c0_2 = arith.constant 0 : index
    %c0_3 = arith.constant 0 : index
    %1 = vector.load %arg2[%c0_2, %c0_3] : memref<16x256xf32, #tpu.memory_space<vmem>>, vector<16x256xf32>
    %2 = vector.shape_cast %1 : vector<16x256xf32> to vector<1x16x256xf32>
    %3 = vector.broadcast %2 : vector<1x16x256xf32> to vector<2x16x256xf32>
    %4 = arith.mulf %0, %3 : vector<2x16x256xf32>
    %cst = arith.constant dense<0.000000e+00> : vector<2x16xf32>
    %5 = vector.multi_reduction <add>, %4, %cst [2] : vector<2x16x256xf32> to vector<2x16xf32>
    %6 = vector.shape_cast %5 : vector<2x16xf32> to vector<2x16x1xf32>
    %c0_4 = arith.constant 0 : index
    %c0_5 = arith.constant 0 : index
    %7 = vector.load %arg3[%c0_4, %c0_5] : memref<16x4xf32, #tpu.memory_space<vmem>>, vector<16x4xf32>
    %c0_6 = arith.constant 0 : index
    %c0_7 = arith.constant 0 : index
    %8 = vector.load %arg4[%c0_6, %c0_7] : memref<16x4xf32, #tpu.memory_space<vmem>>, vector<16x4xf32>
    %9 = vector.shape_cast %7 : vector<16x4xf32> to vector<1x16x4xf32>
    %10 = vector.broadcast %6 : vector<2x16x1xf32> to vector<2x16x4xf32>
    %11 = vector.broadcast %9 : vector<1x16x4xf32> to vector<2x16x4xf32>
    %12 = arith.mulf %10, %11 : vector<2x16x4xf32>
    %cst_8 = arith.constant dense<0.000000e+00> : vector<2x4xf32>
    %13 = vector.multi_reduction <add>, %12, %cst_8 [1] : vector<2x16x4xf32> to vector<2x4xf32>
    %14 = vector.shape_cast %13 : vector<2x4xf32> to vector<2x1x4xf32>
    %cst_9 = arith.constant 0.000000e+00 : f32
    %15 = vector.broadcast %cst_9 : f32 to vector<2x1x4xf32>
    %16 = arith.maximumf %14, %15 : vector<2x1x4xf32>
    %17 = vector.shape_cast %8 : vector<16x4xf32> to vector<1x16x4xf32>
    %18 = vector.broadcast %16 : vector<2x1x4xf32> to vector<2x16x4xf32>
    %19 = vector.broadcast %17 : vector<1x16x4xf32> to vector<2x16x4xf32>
    %20 = arith.mulf %18, %19 : vector<2x16x4xf32>
    %cst_10 = arith.constant dense<0.000000e+00> : vector<2x16xf32>
    %21 = vector.multi_reduction <add>, %20, %cst_10 [2] : vector<2x16x4xf32> to vector<2x16xf32>
    %22 = vector.shape_cast %21 : vector<2x16xf32> to vector<2x16x1xf32>
    %23 = arith.negf %22 : vector<2x16x1xf32>
    %24 = math.exp %23 : vector<2x16x1xf32>
    %cst_11 = arith.constant 1.000000e+00 : f32
    %25 = vector.broadcast %cst_11 : f32 to vector<2x16x1xf32>
    %26 = arith.addf %25, %24 : vector<2x16x1xf32>
    %27 = arith.divf %25, %26 : vector<2x16x1xf32>
    %c0_12 = arith.constant 0 : index
    %c0_13 = arith.constant 0 : index
    %c0_14 = arith.constant 0 : index
    %28 = vector.load %arg1[%c0_12, %c0_13, %c0_14] : memref<2x16x256xf32, #tpu.memory_space<vmem>>, vector<2x16x256xf32>
    %29 = vector.broadcast %27 : vector<2x16x1xf32> to vector<2x16x256xf32>
    %30 = arith.mulf %28, %29 : vector<2x16x256xf32>
    %c0_15 = arith.constant 0 : index
    %c0_16 = arith.constant 0 : index
    %c0_17 = arith.constant 0 : index
    %31 = vector.load %arg5[%c0_15, %c0_16, %c0_17] : memref<2x16x256xf32, #tpu.memory_space<vmem>>, vector<2x16x256xf32>
    tpu.vector_store %arg5[%c0_15, %c0_16, %c0_17], %30 {strides = array<i32>} : memref<2x16x256xf32, #tpu.memory_space<vmem>>, vector<2x16x256xf32>,
    return
  }
  func.func @transform_0(%arg0: i32) -> (i32, i32, i32) {
    %c0_i32 = arith.constant 0 : i32
    %c0_i32_0 = arith.constant 0 : i32
    %c0_i32_1 = arith.constant 0 : i32
    return %arg0, %c0_i32, %c0_i32_0 : i32, i32, i32
  }
  func.func @transform_1(%arg0: i32) -> (i32, i32) {
    %c0_i32 = arith.constant 0 : i32
    %c0_i32_0 = arith.constant 0 : i32
    %c0_i32_1 = arith.constant 0 : i32
    return %c0_i32, %c0_i32_0 : i32, i32
  }
  func.func @transform_2(%arg0: i32) -> (i32, i32) {
    %c0_i32 = arith.constant 0 : i32
    %c0_i32_0 = arith.constant 0 : i32
    %c0_i32_1 = arith.constant 0 : i32
    return %c0_i32, %c0_i32_0 : i32, i32
  }
  func.func @transform_3(%arg0: i32) -> (i32, i32) {
    %c0_i32 = arith.constant 0 : i32
    %c0_i32_0 = arith.constant 0 : i32
    %c0_i32_1 = arith.constant 0 : i32
    return %c0_i32, %c0_i32_0 : i32, i32
  }
  func.func @transform_4(%arg0: i32) -> (i32, i32, i32) {
    %c0_i32 = arith.constant 0 : i32
    %c0_i32_0 = arith.constant 0 : i32
    %c0_i32_1 = arith.constant 0 : i32
    return %arg0, %c0_i32, %c0_i32_0 : i32, i32, i32
  }
}

module attributes {stable_mosaic.version = 11 : i64} {
  func.func @_fcanet_kernel(%arg0: i32, %arg1: memref<2x16x256xf32, #tpu.memory_space<vmem>>, %arg2: memref<16x256xf32, #tpu.memory_space<vmem>>, %arg3: memref<16x4xf32, #tpu.memory_space<vmem>>, %arg4: memref<16x4xf32, #tpu.memory_space<vmem>>, %arg5: memref<2x16x256xf32, #tpu.memory_space<vmem>>) attributes {dimension_semantics = [#tpu.dimension_semantics<parallel>], iteration_bounds = array<i64: 1>, scalar_prefetch = 0 : i64, scratch_operands = 0 : i64, tpu.core_type = #tpu.core_type<tc>, window_params = [{transform_indices = @transform_0, window_bounds = array<i64: 2, 16, 256>}, {pipeline_mode = #tpu.pipeline_mode<synchronous>, transform_indices = @transform_1, window_bounds = array<i64: 16, 256>}, {pipeline_mode = #tpu.pipeline_mode<synchronous>, transform_indices = @transform_2, window_bounds = array<i64: 16, 4>}, {pipeline_mode = #tpu.pipeline_mode<synchronous>, transform_indices = @transform_3, window_bounds = array<i64: 16, 4>}, {transform_indices = @transform_4, window_bounds = array<i64: 2, 16, 256>}]} {
    %c0 = arith.constant 0 : index
    %c0_0 = arith.constant 0 : index
    %c0_1 = arith.constant 0 : index
    %0 = vector.load %arg1[%c0, %c0_0, %c0_1] : memref<2x16x256xf32, #tpu.memory_space<vmem>>, vector<2x16x256xf32>
    %c0_2 = arith.constant 0 : index
    %c0_3 = arith.constant 0 : index
    %1 = vector.load %arg2[%c0_2, %c0_3] : memref<16x256xf32, #tpu.memory_space<vmem>>, vector<16x256xf32>
    %2 = vector.shape_cast %1 : vector<16x256xf32> to vector<1x16x256xf32>
    %3 = vector.broadcast %2 : vector<1x16x256xf32> to vector<2x16x256xf32>
    %4 = arith.mulf %0, %3 : vector<2x16x256xf32>
    %cst = arith.constant dense<0.000000e+00> : vector<2x16xf32>
    %5 = vector.multi_reduction <add>, %4, %cst [2] : vector<2x16x256xf32> to vector<2x16xf32>
    %6 = vector.shape_cast %5 : vector<2x16xf32> to vector<2x16x1xf32>
    %c0_4 = arith.constant 0 : index
    %c0_5 = arith.constant 0 : index
    %7 = vector.load %arg3[%c0_4, %c0_5] : memref<16x4xf32, #tpu.memory_space<vmem>>, vector<16x4xf32>
    %c0_6 = arith.constant 0 : index
    %c0_7 = arith.constant 0 : index
    %8 = vector.load %arg4[%c0_6, %c0_7] : memref<16x4xf32, #tpu.memory_space<vmem>>, vector<16x4xf32>
    %9 = vector.shape_cast %7 : vector<16x4xf32> to vector<1x16x4xf32>
    %10 = vector.broadcast %6 : vector<2x16x1xf32> to vector<2x16x4xf32>
    %11 = vector.broadcast %9 : vector<1x16x4xf32> to vector<2x16x4xf32>
    %12 = arith.mulf %10, %11 : vector<2x16x4xf32>
    %cst_8 = arith.constant dense<0.000000e+00> : vector<2x4xf32>
    %13 = vector.multi_reduction <add>, %12, %cst_8 [1] : vector<2x16x4xf32> to vector<2x4xf32>
    %14 = vector.shape_cast %13 : vector<2x4xf32> to vector<2x1x4xf32>
    %cst_9 = arith.constant 0.000000e+00 : f32
    %15 = vector.broadcast %cst_9 : f32 to vector<2x1x4xf32>
    %16 = arith.maximumf %14, %15 : vector<2x1x4xf32>
    %17 = vector.shape_cast %8 : vector<16x4xf32> to vector<1x16x4xf32>
    %18 = vector.broadcast %16 : vector<2x1x4xf32> to vector<2x16x4xf32>
    %19 = vector.broadcast %17 : vector<1x16x4xf32> to vector<2x16x4xf32>
    %20 = arith.mulf %18, %19 : vector<2x16x4xf32>
    %cst_10 = arith.constant dense<0.000000e+00> : vector<2x16xf32>
    %21 = vector.multi_reduction <add>, %20, %cst_10 [2] : vector<2x16x4xf32> to vector<2x16xf32>
    %22 = vector.shape_cast %21 : vector<2x16xf32> to vector<2x16x1xf32>
    %23 = arith.negf %22 : vector<2x16x1xf32>
    %24 = math.exp %23 : vector<2x16x1xf32>
    %cst_11 = arith.constant 1.000000e+00 : f32
    %25 = vector.broadcast %cst_11 : f32 to vector<2x16x1xf32>
    %26 = arith.addf %25, %24 : vector<2x16x1xf32>
    %27 = arith.divf %25, %26 : vector<2x16x1xf32>
    %c0_12 = arith.constant 0 : index
    %c0_13 = arith.constant 0 : index
    %c0_14 = arith.constant 0 : index
    %28 = vector.load %arg1[%c0_12, %c0_13, %c0_14] : memref<2x16x256xf32, #tpu.memory_space<vmem>>, vector<2x16x256xf32>
    %29 = vector.broadcast %27 : vector<2x16x1xf32> to vector<2x16x256xf32>
    %30 = arith.mulf %28, %29 : vector<2x16x256xf32>
    %c0_15 = arith.constant 0 : index
    %c0_16 = arith.constant 0 : index
    %c0_17 = arith.constant 0 : index
    %31 = vector.load %arg5[%c0_15, %c0_16, %c0_17] : memref<2x16x256xf32, #tpu.memory_space<vmem>>, vector<2x16x256xf32>
    tpu.vector_store %arg5[%c0_15, %c0_16, %c0_17], %30 {strides = array<i32>} : memref<2x16x256xf32, #tpu.memory_space<vmem>>, vector<2x16x256xf32>,
    return
  }
  func.func @transform_0(%arg0: i32) -> (i32, i32, i32) {
    %c0_i32 = arith.constant 0 : i32
    %c0_i32_0 = arith.constant 0 : i32
    %c0_i32_1 = arith.constant 0 : i32
    return %arg0, %c0_i32, %c0_i32_0 : i32, i32, i32
  }
  func.func @transform_1(%arg0: i32) -> (i32, i32) {
    %c0_i32 = arith.constant 0 : i32
    %c0_i32_0 = arith.constant 0 : i32
    %c0_i32_1 = arith.constant 0 : i32
    return %c0_i32, %c0_i32_0 : i32, i32
  }
  func.func @transform_2(%arg0: i32) -> (i32, i32) {
    %c0_i32 = arith.constant 0 : i32
    %c0_i32_0 = arith.constant 0 : i32
    %c0_i32_1 = arith.constant 0 : i32
    return %c0_i32, %c0_i32_0 : i32, i32
  }
  func.func @transform_3(%arg0: i32) -> (i32, i32) {
    %c0_i32 = arith.constant 0 : i32
    %c0_i32_0 = arith.constant 0 : i32
    %c0_i32_1 = arith.constant 0 : i32
    return %c0_i32, %c0_i32_0 : i32, i32
  }
  func.func @transform_4(%arg0: i32) -> (i32, i32, i32) {
    %c0_i32 = arith.constant 0 : i32
    %c0_i32_0 = arith.constant 0 : i32
    %c0_i32_1 = arith.constant 0 : i32
    return %arg0, %c0_i32, %c0_i32_0 : i32, i32, i32
  }
}

</mosaic_0001>

<llo_original>
// kernel: tpu_custom_call.1
$region0: #{tpu_custom_call.1}
  #allocation0 [shape = 'u32[]', space=smem, size = 0x4, offset = 0x4, fixed_abs, tag = 'smem constant byte address 0x4 - core index']
  #allocation1 [shape = 'u32[144,128]{1,0:T(1,128)}', space=vmem, size = 0x12000, scoped, tag = 'internal scratch']
  %s0 = inlined_call_operand.hbm [shape: f32[2,16,256], index: 0, kind: input, shape index: {}]
  %s1 = inlined_call_operand.vmem [shape: f32[16,256], index: 1, kind: input, shape index: {}]
  %s2 = inlined_call_operand.vmem [shape: f32[16,4], index: 2, kind: input, shape index: {}]
  %s3 = inlined_call_operand.vmem [shape: f32[16,4], index: 3, kind: input, shape index: {}]
  %s4 = inlined_call_operand.hbm [shape: f32[2,16,256], index: 4, kind: output, shape index: {}]
  %s5 = sld [smem:[#allocation0]]
  $region30: #{tpu_custom_call.1} parent=0
    _
  %s7 = ssub.s32 1, %s5
  %s8 = scalar_select 0, %s7, %s5
  $region1: #{tpu_custom_call.1} parent=0
    #allocation2 [shape = 'u8[32768]{0}', space=vmem, size = 0x8000, scoped, tag = 'input window, operand 0, single buffered']
    #allocation3 [shape = 's32[1]{0}', space=sflag, size = 0x4, scoped, tag = 'scoped memory for tpu_custom_call.1']
    #allocation4 [shape = 's32[1]{0}', space=sflag, size = 0x4, scoped, tag = 'scoped memory for tpu_custom_call.1']
    #allocation5 [shape = 'u8[32768]{0}', space=vmem, size = 0x8000, scoped, tag = 'output window, operand 0, single buffered']
    %9 = vsyncpa [#allocation3], 0
    %10 = vsyncpa [#allocation4], 0
    // Predicated region
    $region2: #{tpu_custom_call.1} parent=1 // pred_check
      _
    $region3: #{tpu_custom_call.1} parent=1 // pred_check_branch
      %12 = sbr.rel (0) target = $region5
    $region4: #{tpu_custom_call.1} parent=1 // pred_region
      %s14 = ssub.s32 1024, 1024
      %15 = vsyncadd [#allocation3], %s14
      %s16 = sshll.u32 [#allocation2], 4
      %s17 = int_to_ptr.vmem [resolvable:$true] %s16
      %22 = dma.hbm_to_vmem [thread:$0]  %s0, 1024, %s17, [#allocation3], 256, 256, 16
    $region5: #{tpu_custom_call.1} parent=1 // pred_fallthru
      _
    // Predicated region
    $region6: #{tpu_custom_call.1} parent=1 // pred_check
      _
    $region7: #{tpu_custom_call.1} parent=1 // pred_check_branch
      %24 = sbr.rel (0) target = $region9
    $region8: #{tpu_custom_call.1} parent=1 // pred_region
      _
    $region9: #{tpu_custom_call.1} parent=1 // pred_fallthru
      _
    // Predicated region
    $region10: #{tpu_custom_call.1} parent=1 // pred_check
      _
    $region11: #{tpu_custom_call.1} parent=1 // pred_check_branch
      %26 = sbr.rel (0) target = $region13
    $region12: #{tpu_custom_call.1} parent=1 // pred_region
      _
    $region13: #{tpu_custom_call.1} parent=1 // pred_fallthru
      _
    // Predicated region
    $region14: #{tpu_custom_call.1} parent=1 // pred_check
      _
    $region15: #{tpu_custom_call.1} parent=1 // pred_check_branch
      %28 = sbr.rel (0) target = $region17
    $region16: #{tpu_custom_call.1} parent=1 // pred_region
      _
    $region17: #{tpu_custom_call.1} parent=1 // pred_fallthru
      _
    // Predicated region
    $region18: #{tpu_custom_call.1} parent=1 // pred_check
      _
    $region19: #{tpu_custom_call.1} parent=1 // pred_check_branch
      %30 = sbr.rel (0) target = $region21
    $region20: #{tpu_custom_call.1} parent=1 // pred_region
      %31 = dma.done [#allocation3], 1024
    $region21: #{tpu_custom_call.1} parent=1 // pred_fallthru
      _
    %v32 = vld [vmem:[#allocation2] sm:$0xff]
    %v33 = vld [vmem:[#allocation2 + $0x8] sm:$0xff]
    %v34 = vld [vmem:[#allocation2 + $0x10] sm:$0xff]
    %v35 = vld [vmem:[#allocation2 + $0x18] sm:$0xff]
    %v36 = vld [vmem:[#allocation2 + $0x20] sm:$0xff]
    %v37 = vld [vmem:[#allocation2 + $0x28] sm:$0xff]
    %v38 = vld [vmem:[#allocation2 + $0x30] sm:$0xff]
    %v39 = vld [vmem:[#allocation2 + $0x38] sm:$0xff]
    %v40 = vld [vmem:[%s1] sm:$0xff]
    %v41 = vld [vmem:[%s1 + $0x8] sm:$0xff]
    %v42 = vld [vmem:[%s1 + $0x10] sm:$0xff]
    %v43 = vld [vmem:[%s1 + $0x18] sm:$0xff]
    %v44 = vmul.f32 %v32, %v40
    %v45 = vmul.f32 %v33, %v41
    %v46 = vmul.f32 %v34, %v42
    %v47 = vmul.f32 %v35, %v43
    %v48 = vmul.f32 %v36, %v40
    %v49 = vmul.f32 %v37, %v41
    %v50 = vmul.f32 %v38, %v42
    %v51 = vmul.f32 %v39, %v43
    %v52 = vadd.f32 %v44, %v45
    %53 = vadd.xlane.f32.xlu0 %v52
    %v54 = vpop.xlane.xlu0 %53
    %v55 = vadd.f32 %v46, %v47
    %56 = vadd.xlane.f32.xlu0 %v55
    %v57 = vpop.xlane.xlu0 %56
    %v58 = vadd.f32 %v48, %v49
    %59 = vadd.xlane.f32.xlu0 %v58
    %v60 = vpop.xlane.xlu0 %59
    %v61 = vadd.f32 %v50, %v51
    %62 = vadd.xlane.f32.xlu0 %v61
    %v63 = vpop.xlane.xlu0 %62
    %v64 = vld [vmem:[%s2] sm:$0xff]
    %v65 = vld [vmem:[%s2 + $0x8] sm:$0xff]
    %v66 = vld [vmem:[%s3] sm:$0xff]
    %v67 = vld [vmem:[%s3 + $0x8] sm:$0xff]
    %v68 = vmul.f32 %v54, %v64
    %v69 = vmul.f32 %v57, %v65
    %v70 = vmul.f32 %v60, %v64
    %v71 = vmul.f32 %v63, %v65
    %vm72 = vcmask 31744
    %v73 = vsel %vm72, %v68, 0.0
    %v74 = vsel %vm72, %v69, 0.0
    %v75 = vadd.f32 %v73, %v74
    %v76 = vrot.slane %v75, 4
    %v77 = vadd.f32 %v75, %v76
    %v78 = vrot.slane %v77, 2
    %v79 = vadd.f32 %v77, %v78
    %v80 = vrot.slane %v79, 1
    %v81 = vadd.f32 %v79, %v80
    %v82 = vsel %vm72, %v70, 0.0
    %v83 = vsel %vm72, %v71, 0.0
    %v84 = vadd.f32 %v82, %v83
    %v85 = vrot.slane %v84, 4
    %v86 = vadd.f32 %v84, %v85
    %v87 = vrot.slane %v86, 2
    %v88 = vadd.f32 %v86, %v87
    %v89 = vrot.slane %v88, 1
    %v90 = vadd.f32 %v88, %v89
    %v91 = vmax.f32 %v81, 0.0
    %v92 = vmax.f32 %v90, 0.0
    %v93 = vmul.f32 %v91, %v66
    %v94 = vmul.f32 %v91, %v67
    %v95 = vmul.f32 %v92, %v66
    %v96 = vmul.f32 %v92, %v67
    %v97 = vsel %vm72, %v93, 0.0
    %98 = vadd.xlane.f32.xlu0 %v97
    %v99 = vpop.xlane.xlu0 %98
    %v100 = vsel %vm72, %v94, 0.0
    %101 = vadd.xlane.f32.xlu0 %v100
    %v102 = vpop.xlane.xlu0 %101
    %v103 = vsel %vm72, %v95, 0.0
    %104 = vadd.xlane.f32.xlu0 %v103
    %v105 = vpop.xlane.xlu0 %104
    %v106 = vsel %vm72, %v96, 0.0
    %107 = vadd.xlane.f32.xlu0 %v106
    %v108 = vpop.xlane.xlu0 %107
    %v109 = vxor.u32 %v99, 2147483648
    %v110 = vxor.u32 %v102, 2147483648
    %v111 = vxor.u32 %v105, 2147483648
    %v112 = vxor.u32 %v108, 2147483648
    %v113 = vmul.f32 %v109, 1.442695
    %v114 = vpow.pop %v113
    %v115 = vmul.f32 %v110, 1.442695
    %v116 = vpow.pop %v115
    %v117 = vmul.f32 %v111, 1.442695
    %v118 = vpow.pop %v117
    %v119 = vmul.f32 %v112, 1.442695
    %v120 = vpow.pop %v119
    %v121 = vadd.f32 %v114, 1.0
    %v122 = vadd.f32 %v116, 1.0
    %v123 = vadd.f32 %v118, 1.0
    %v124 = vadd.f32 %v120, 1.0
    %v125 = vrcp.pop %v121
    %v126 = vmul.f32 1.0, %v125
    %v127 = vrcp.pop %v122
    %v128 = vmul.f32 1.0, %v127
    %v129 = vrcp.pop %v123
    %v130 = vmul.f32 1.0, %v129
    %v131 = vrcp.pop %v124
    %v132 = vmul.f32 1.0, %v131
    %v133 = vmul.f32 %v32, %v126
    %v134 = vmul.f32 %v33, %v126
    %v135 = vmul.f32 %v34, %v128
    %v136 = vmul.f32 %v35, %v128
    %v137 = vmul.f32 %v36, %v130
    %v138 = vmul.f32 %v37, %v130
    %v139 = vmul.f32 %v38, %v132
    %v140 = vmul.f32 %v39, %v132
    %141 = vst [vmem:[#allocation5] sm:$0xff] %v133
    %142 = vst [vmem:[#allocation5 + $0x8] sm:$0xff] %v134
    %143 = vst [vmem:[#allocation5 + $0x10] sm:$0xff] %v135
    %144 = vst [vmem:[#allocation5 + $0x18] sm:$0xff] %v136
    %145 = vst [vmem:[#allocation5 + $0x20] sm:$0xff] %v137
    %146 = vst [vmem:[#allocation5 + $0x28] sm:$0xff] %v138
    %147 = vst [vmem:[#allocation5 + $0x30] sm:$0xff] %v139
    %148 = vst [vmem:[#allocation5 + $0x38] sm:$0xff] %v140
    // Predicated region
    $region22: #{tpu_custom_call.1} parent=1 // pred_check
      _
    $region23: #{tpu_custom_call.1} parent=1 // pred_check_branch
      %150 = sbr.rel (0) target = $region25
    $region24: #{tpu_custom_call.1} parent=1 // pred_region
      %s152 = ssub.s32 1024, 1024
      %153 = vsyncadd [#allocation4], %s152
      %s154 = sshll.u32 [#allocation5], 4
      %s155 = int_to_ptr.vmem [resolvable:$true] %s154
      %160 = dma.vmem_to_hbm [thread:$0]  %s155, 1024, %s4, [#allocation4], 256, 256, 16
    $region25: #{tpu_custom_call.1} parent=1 // pred_fallthru
      _
    // Predicated region
    $region26: #{tpu_custom_call.1} parent=1 // pred_check
      _
    $region27: #{tpu_custom_call.1} parent=1 // pred_check_branch
      %162 = sbr.rel (0) target = $region29
    $region28: #{tpu_custom_call.1} parent=1 // pred_region
      %163 = dma.done [#allocation4], 1024
    $region29: #{tpu_custom_call.1} parent=1 // pred_fallthru
      _
    %164 = vsyncpa [#allocation3], 1
    %165 = vsyncpa [#allocation4], 1

// kernel: tpu_custom_call.1
$region0: #{tpu_custom_call.1}
  #allocation0 [shape = 'u32[]', space=smem, size = 0x4, offset = 0x4, fixed_abs, tag = 'smem constant byte address 0x4 - core index']
  #allocation1 [shape = 'u32[144,128]{1,0:T(1,128)}', space=vmem, size = 0x12000, scoped, tag = 'internal scratch']
  %s0 = inlined_call_operand.hbm [shape: f32[2,16,256], index: 0, kind: input, shape index: {}]
  %s1 = inlined_call_operand.vmem [shape: f32[16,256], index: 1, kind: input, shape index: {}]
  %s2 = inlined_call_operand.vmem [shape: f32[16,4], index: 2, kind: input, shape index: {}]
  %s3 = inlined_call_operand.vmem [shape: f32[16,4], index: 3, kind: input, shape index: {}]
  %s4 = inlined_call_operand.hbm [shape: f32[2,16,256], index: 4, kind: output, shape index: {}]
  %s5 = sld [smem:[#allocation0]]
  $region30: #{tpu_custom_call.1} parent=0
    _
  %s7 = ssub.s32 1, %s5
  %s8 = scalar_select 0, %s7, %s5
  $region1: #{tpu_custom_call.1} parent=0
    #allocation2 [shape = 'u8[32768]{0}', space=vmem, size = 0x8000, scoped, tag = 'input window, operand 0, single buffered']
    #allocation3 [shape = 's32[1]{0}', space=sflag, size = 0x4, scoped, tag = 'scoped memory for tpu_custom_call.1']
    #allocation4 [shape = 's32[1]{0}', space=sflag, size = 0x4, scoped, tag = 'scoped memory for tpu_custom_call.1']
    #allocation5 [shape = 'u8[32768]{0}', space=vmem, size = 0x8000, scoped, tag = 'output window, operand 0, single buffered']
    %9 = vsyncpa [#allocation3], 0
    %10 = vsyncpa [#allocation4], 0
    // Predicated region
    $region2: #{tpu_custom_call.1} parent=1 // pred_check
      _
    $region3: #{tpu_custom_call.1} parent=1 // pred_check_branch
      %12 = sbr.rel (0) target = $region5
    $region4: #{tpu_custom_call.1} parent=1 // pred_region
      %s14 = ssub.s32 1024, 1024
      %15 = vsyncadd [#allocation3], %s14
      %s16 = sshll.u32 [#allocation2], 4
      %s17 = int_to_ptr.vmem [resolvable:$true] %s16
      %22 = dma.hbm_to_vmem [thread:$0]  %s0, 1024, %s17, [#allocation3], 256, 256, 16
    $region5: #{tpu_custom_call.1} parent=1 // pred_fallthru
      _
    // Predicated region
    $region6: #{tpu_custom_call.1} parent=1 // pred_check
      _
    $region7: #{tpu_custom_call.1} parent=1 // pred_check_branch
      %24 = sbr.rel (0) target = $region9
    $region8: #{tpu_custom_call.1} parent=1 // pred_region
      _
    $region9: #{tpu_custom_call.1} parent=1 // pred_fallthru
      _
    // Predicated region
    $region10: #{tpu_custom_call.1} parent=1 // pred_check
      _
    $region11: #{tpu_custom_call.1} parent=1 // pred_check_branch
      %26 = sbr.rel (0) target = $region13
    $region12: #{tpu_custom_call.1} parent=1 // pred_region
      _
    $region13: #{tpu_custom_call.1} parent=1 // pred_fallthru
      _
    // Predicated region
    $region14: #{tpu_custom_call.1} parent=1 // pred_check
      _
    $region15: #{tpu_custom_call.1} parent=1 // pred_check_branch
      %28 = sbr.rel (0) target = $region17
    $region16: #{tpu_custom_call.1} parent=1 // pred_region
      _
    $region17: #{tpu_custom_call.1} parent=1 // pred_fallthru
      _
    // Predicated region
    $region18: #{tpu_custom_call.1} parent=1 // pred_check
      _
    $region19: #{tpu_custom_call.1} parent=1 // pred_check_branch
      %30 = sbr.rel (0) target = $region21
    $region20: #{tpu_custom_call.1} parent=1 // pred_region
      %31 = dma.done [#allocation3], 1024
    $region21: #{tpu_custom_call.1} parent=1 // pred_fallthru
      _
    %v32 = vld [vmem:[#allocation2] sm:$0xff]
    %v33 = vld [vmem:[#allocation2 + $0x8] sm:$0xff]
    %v34 = vld [vmem:[#allocation2 + $0x10] sm:$0xff]
    %v35 = vld [vmem:[#allocation2 + $0x18] sm:$0xff]
    %v36 = vld [vmem:[#allocation2 + $0x20] sm:$0xff]
    %v37 = vld [vmem:[#allocation2 + $0x28] sm:$0xff]
    %v38 = vld [vmem:[#allocation2 + $0x30] sm:$0xff]
    %v39 = vld [vmem:[#allocation2 + $0x38] sm:$0xff]
    %v40 = vld [vmem:[%s1] sm:$0xff]
    %v41 = vld [vmem:[%s1 + $0x8] sm:$0xff]
    %v42 = vld [vmem:[%s1 + $0x10] sm:$0xff]
    %v43 = vld [vmem:[%s1 + $0x18] sm:$0xff]
    %v44 = vmul.f32 %v32, %v40
    %v45 = vmul.f32 %v33, %v41
    %v46 = vmul.f32 %v34, %v42
    %v47 = vmul.f32 %v35, %v43
    %v48 = vmul.f32 %v36, %v40
    %v49 = vmul.f32 %v37, %v41
    %v50 = vmul.f32 %v38, %v42
    %v51 = vmul.f32 %v39, %v43
    %v52 = vadd.f32 %v44, %v45
    %53 = vadd.xlane.f32.xlu0 %v52
    %v54 = vpop.xlane.xlu0 %53
    %v55 = vadd.f32 %v46, %v47
    %56 = vadd.xlane.f32.xlu0 %v55
    %v57 = vpop.xlane.xlu0 %56
    %v58 = vadd.f32 %v48, %v49
    %59 = vadd.xlane.f32.xlu0 %v58
    %v60 = vpop.xlane.xlu0 %59
    %v61 = vadd.f32 %v50, %v51
    %62 = vadd.xlane.f32.xlu0 %v61
    %v63 = vpop.xlane.xlu0 %62
    %v64 = vld [vmem:[%s2] sm:$0xff]
    %v65 = vld [vmem:[%s2 + $0x8] sm:$0xff]
    %v66 = vld [vmem:[%s3] sm:$0xff]
    %v67 = vld [vmem:[%s3 + $0x8] sm:$0xff]
    %v68 = vmul.f32 %v54, %v64
    %v69 = vmul.f32 %v57, %v65
    %v70 = vmul.f32 %v60, %v64
    %v71 = vmul.f32 %v63, %v65
    %vm72 = vcmask 31744
    %v73 = vsel %vm72, %v68, 0.0
    %v74 = vsel %vm72, %v69, 0.0
    %v75 = vadd.f32 %v73, %v74
    %v76 = vrot.slane %v75, 4
    %v77 = vadd.f32 %v75, %v76
    %v78 = vrot.slane %v77, 2
    %v79 = vadd.f32 %v77, %v78
    %v80 = vrot.slane %v79, 1
    %v81 = vadd.f32 %v79, %v80
    %v82 = vsel %vm72, %v70, 0.0
    %v83 = vsel %vm72, %v71, 0.0
    %v84 = vadd.f32 %v82, %v83
    %v85 = vrot.slane %v84, 4
    %v86 = vadd.f32 %v84, %v85
    %v87 = vrot.slane %v86, 2
    %v88 = vadd.f32 %v86, %v87
    %v89 = vrot.slane %v88, 1
    %v90 = vadd.f32 %v88, %v89
    %v91 = vmax.f32 %v81, 0.0
    %v92 = vmax.f32 %v90, 0.0
    %v93 = vmul.f32 %v91, %v66
    %v94 = vmul.f32 %v91, %v67
    %v95 = vmul.f32 %v92, %v66
    %v96 = vmul.f32 %v92, %v67
    %v97 = vsel %vm72, %v93, 0.0
    %98 = vadd.xlane.f32.xlu0 %v97
    %v99 = vpop.xlane.xlu0 %98
    %v100 = vsel %vm72, %v94, 0.0
    %101 = vadd.xlane.f32.xlu0 %v100
    %v102 = vpop.xlane.xlu0 %101
    %v103 = vsel %vm72, %v95, 0.0
    %104 = vadd.xlane.f32.xlu0 %v103
    %v105 = vpop.xlane.xlu0 %104
    %v106 = vsel %vm72, %v96, 0.0
    %107 = vadd.xlane.f32.xlu0 %v106
    %v108 = vpop.xlane.xlu0 %107
    %v109 = vxor.u32 %v99, 2147483648
    %v110 = vxor.u32 %v102, 2147483648
    %v111 = vxor.u32 %v105, 2147483648
    %v112 = vxor.u32 %v108, 2147483648
    %v113 = vmul.f32 %v109, 1.442695
    %v114 = vpow.pop %v113
    %v115 = vmul.f32 %v110, 1.442695
    %v116 = vpow.pop %v115
    %v117 = vmul.f32 %v111, 1.442695
    %v118 = vpow.pop %v117
    %v119 = vmul.f32 %v112, 1.442695
    %v120 = vpow.pop %v119
    %v121 = vadd.f32 %v114, 1.0
    %v122 = vadd.f32 %v116, 1.0
    %v123 = vadd.f32 %v118, 1.0
    %v124 = vadd.f32 %v120, 1.0
    %v125 = vrcp.pop %v121
    %v126 = vmul.f32 1.0, %v125
    %v127 = vrcp.pop %v122
    %v128 = vmul.f32 1.0, %v127
    %v129 = vrcp.pop %v123
    %v130 = vmul.f32 1.0, %v129
    %v131 = vrcp.pop %v124
    %v132 = vmul.f32 1.0, %v131
    %v133 = vmul.f32 %v32, %v126
    %v134 = vmul.f32 %v33, %v126
    %v135 = vmul.f32 %v34, %v128
    %v136 = vmul.f32 %v35, %v128
    %v137 = vmul.f32 %v36, %v130
    %v138 = vmul.f32 %v37, %v130
    %v139 = vmul.f32 %v38, %v132
    %v140 = vmul.f32 %v39, %v132
    %141 = vst [vmem:[#allocation5] sm:$0xff] %v133
    %142 = vst [vmem:[#allocation5 + $0x8] sm:$0xff] %v134
    %143 = vst [vmem:[#allocation5 + $0x10] sm:$0xff] %v135
    %144 = vst [vmem:[#allocation5 + $0x18] sm:$0xff] %v136
    %145 = vst [vmem:[#allocation5 + $0x20] sm:$0xff] %v137
    %146 = vst [vmem:[#allocation5 + $0x28] sm:$0xff] %v138
    %147 = vst [vmem:[#allocation5 + $0x30] sm:$0xff] %v139
    %148 = vst [vmem:[#allocation5 + $0x38] sm:$0xff] %v140
    // Predicated region
    $region22: #{tpu_custom_call.1} parent=1 // pred_check
      _
    $region23: #{tpu_custom_call.1} parent=1 // pred_check_branch
      %150 = sbr.rel (0) target = $region25
    $region24: #{tpu_custom_call.1} parent=1 // pred_region
      %s152 = ssub.s32 1024, 1024
      %153 = vsyncadd [#allocation4], %s152
      %s154 = sshll.u32 [#allocation5], 4
      %s155 = int_to_ptr.vmem [resolvable:$true] %s154
      %160 = dma.vmem_to_hbm [thread:$0]  %s155, 1024, %s4, [#allocation4], 256, 256, 16
    $region25: #{tpu_custom_call.1} parent=1 // pred_fallthru
      _
    // Predicated region
    $region26: #{tpu_custom_call.1} parent=1 // pred_check
      _
    $region27: #{tpu_custom_call.1} parent=1 // pred_check_branch
      %162 = sbr.rel (0) target = $region29
    $region28: #{tpu_custom_call.1} parent=1 // pred_region
      %163 = dma.done [#allocation4], 1024
    $region29: #{tpu_custom_call.1} parent=1 // pred_fallthru
      _
    %164 = vsyncpa [#allocation3], 1
    %165 = vsyncpa [#allocation4], 1

</llo_original>
